<compile_context>
chip_gen: v5e
topology: v5e:2x2
jax: 0.10.0
libtpu: 0.0.40
codegen_flags: <defaults>
</compile_context>

<pallas_src>
import jax
import jax.numpy as jnp
import numpy as np
from jax.experimental import pallas as pl
from jax.experimental.pallas import tpu as pltpu

# ---------------------------------------------------------------------------
# "MNISTNet" parameter keys (typical 2-conv / 2-fc MNIST net state_dict),
# with '.' stripped exactly as MergePath.__init__ does.
# ---------------------------------------------------------------------------
MNISTNET_KEYS = [
    "conv1weight", "conv1bias",
    "conv2weight", "conv2bias",
    "fc1weight",   "fc1bias",
    "fc2weight",   "fc2bias",
]

PATH_LENGTH = 10
NUM_STEPS = PATH_LENGTH - 2            # 8
NUM_PARAMS = len(MNISTNET_KEYS)        # 8


# ---------------------------------------------------------------------------
# Pallas kernel: elementwise sigmoid over the lane-dense coefficient slab.
# ---------------------------------------------------------------------------
def _sigmoid_kernel(c_ref, o_ref):
    o_ref[...] = jax.nn.sigmoid(c_ref[...])


@jax.jit
def merge_path_sigmoid(coeff_slab: jax.Array) -> jax.Array:
    """Sigmoid over the packed [NUM_STEPS, NUM_PARAMS] coefficient slab.

    Single whole-array VMEM block, no grid.  The slab is reshaped to a
    lane-dense (1, 64) view for the kernel and reshaped back afterwards.
    """
    flat = coeff_slab.reshape(1, NUM_STEPS * NUM_PARAMS)
    sig_flat = pl.pallas_call(
        _sigmoid_kernel,
        out_shape=jax.ShapeDtypeStruct(flat.shape, flat.dtype),
        in_specs=[pl.BlockSpec(memory_space=pltpu.MemorySpace.VMEM)],
        out_specs=pl.BlockSpec(memory_space=pltpu.MemorySpace.VMEM),
    )(flat)
    return sig_flat.reshape(coeff_slab.shape)


@jax.jit
def merge_path_forward(coeff_slab: jax.Array):
    """Mirror of MergePath.forward().

    Returns a list (length NUM_STEPS) of dicts key -> shape-(1,) sigmoid
    coefficient.  Everything stays on device; the per-step/per-key structure
    is built from static slices inside this single jitted dispatch (no D2H
    transfer, no per-scalar device slicing loop at call time).
    """
    sig = merge_path_sigmoid(coeff_slab)
    coeffs_path = []
    for step in range(NUM_STEPS):
        coeffs_step = {
            key: sig[step, p:p + 1]                 # shape (1,), traced once
            for p, key in enumerate(MNISTNET_KEYS)
        }
        coeffs_path.append(coeffs_step)
    return coeffs_path


# ---------------------------------------------------------------------------
# Deterministic parameter initialization (matches MergePath.__init__, where
# the random term is multiplied by 0):
#   initial_coeff = step / (path_length - 1), clamped to [1e-6, 1 - 1e-6]
# ---------------------------------------------------------------------------
def init_coeff_slab():
    steps = jnp.arange(NUM_STEPS, dtype=jnp.float32) / (PATH_LENGTH - 1)
    slab = jnp.broadcast_to(steps[:, None], (NUM_STEPS, NUM_PARAMS))
    return jnp.clip(slab, 1e-6, 1.0 - 1e-6).astype(jnp.float32)


if __name__ == "__main__":
    key = jax.random.PRNGKey(0)        # unused: spec's init noise is 0 * rand(1)
    coeff_slab = init_coeff_slab()     # [8, 8] f32, deterministic

    coeffs_path = merge_path_forward(coeff_slab)
    jax.block_until_ready(coeffs_path)

    # Sanity check against pure-JAX reference (single bulk host comparison,
    # off the hot path).
    ref = np.asarray(jax.nn.sigmoid(coeff_slab))
    got = np.stack(
        [np.concatenate([np.asarray(coeffs_path[s][k]) for k in MNISTNET_KEYS])
         for s in range(NUM_STEPS)]
    )
    assert got.shape == (NUM_STEPS, NUM_PARAMS)
    assert np.allclose(got, ref, atol=1e-6), "mismatch vs reference sigmoid"
    assert np.all((got > 0.0) & (got < 1.0))

    print("KERNEL_OK")
</pallas_src>

<mosaic_0001>
module attributes {stable_mosaic.version = 11 : i64} {
  func.func @_sigmoid_kernel(%arg0: memref<1x64xf32, #tpu.memory_space<vmem>>, %arg1: memref<1x64xf32, #tpu.memory_space<vmem>>) attributes {dimension_semantics = [], scalar_prefetch = 0 : i64, scratch_operands = 0 : i64, tpu.core_type = #tpu.core_type<tc>} {
    %c0 = arith.constant 0 : index
    %c0_0 = arith.constant 0 : index
    %0 = vector.load %arg0[%c0, %c0_0] : memref<1x64xf32, #tpu.memory_space<vmem>>, vector<1x64xf32>
    %1 = arith.negf %0 : vector<1x64xf32>
    %2 = math.exp %1 : vector<1x64xf32>
    %cst = arith.constant 1.000000e+00 : f32
    %3 = vector.broadcast %cst : f32 to vector<1x64xf32>
    %4 = arith.addf %3, %2 : vector<1x64xf32>
    %5 = arith.divf %3, %4 : vector<1x64xf32>
    %c0_1 = arith.constant 0 : index
    %c0_2 = arith.constant 0 : index
    %6 = vector.load %arg1[%c0_1, %c0_2] : memref<1x64xf32, #tpu.memory_space<vmem>>, vector<1x64xf32>
    tpu.vector_store %arg1[%c0_1, %c0_2], %5 {strides = array<i32>} : memref<1x64xf32, #tpu.memory_space<vmem>>, vector<1x64xf32>,
    return
  }
}

</mosaic_0001>

<llo_original>
// kernel: merge_path_sigmoid.1
$region0: #{merge_path_sigmoid.1}
  #allocation0 [shape = 'u32[]', space=smem, size = 0x4, offset = 0x4, fixed_abs, tag = 'smem constant byte address 0x4 - core index']
  #allocation1 [shape = 'u32[72,128]{1,0:T(1,128)}', space=vmem, size = 0x9000, scoped, tag = 'internal scratch']
  %s0 = inlined_call_operand.vmem [shape: f32[1,64], index: 0, kind: input, shape index: {}]
  %s1 = inlined_call_operand.vmem [shape: f32[1,64], index: 1, kind: output, shape index: {}]
  %s2 = sld [smem:[#allocation0]]
  $region14: #{merge_path_sigmoid.1} parent=0
    _
  %s4 = ssub.s32 1, %s2
  %s5 = scalar_select 0, %s4, %s2
  // Predicated region
  $region2: #{merge_path_sigmoid.1} parent=0 // pred_check
    _
  $region3: #{merge_path_sigmoid.1} parent=0 // pred_check_branch
    %7 = sbr.rel (0) target = $region5
  $region4: #{merge_path_sigmoid.1} parent=0 // pred_region
    _
  $region5: #{merge_path_sigmoid.1} parent=0 // pred_fallthru
    _
  %v8 = vld [vmem:[%s0] sm:$0x1]
  %v9 = vxor.u32 %v8, 2147483648
  %v10 = vmul.f32 %v9, 1.442695
  %v11 = vpow.pop %v10
  %v12 = vadd.f32 %v11, 1.0
  %v13 = vrcp.pop %v12
  %v14 = vmul.f32 %v12, %v13
  %v15 = vsub.f32 1.0, %v14
  %v16 = vmul.f32 %v13, %v15
  %v17 = vadd.f32 %v13, %v16
  %vm18 = vweird.f32 %v12
  %vm19 = vweird.f32 %v13
  %vm20 = vmor %vm18, %vm19
  %v21 = vsel %vm20, %v13, %v17
  %v22 = vand.u32 2147483647, %v12
  %vm23 = vcmp.eq.f32.partialorder %v22, 8.507059e+37
  %v24 = vand.u32 %v12, 2147483648
  %v25 = vor.u32 1.1754944e-38, %v24
  %v26 = vsel %vm23, %v25, %v21
  %v27 = vmul.f32 1.0, %v26
  %vm28 = vcmask 516096
  %29 = vst.msk [vmem:[%s1] sm:$0x1] %vm28, %v27
  // Predicated region
  $region6: #{merge_path_sigmoid.1} parent=0 // pred_check
    _
  $region7: #{merge_path_sigmoid.1} parent=0 // pred_check_branch
    %31 = sbr.rel (0) target = $region9
  $region8: #{merge_path_sigmoid.1} parent=0 // pred_region
    _
  $region9: #{merge_path_sigmoid.1} parent=0 // pred_fallthru
    _
  // Predicated region
  $region10: #{merge_path_sigmoid.1} parent=0 // pred_check
    _
  $region11: #{merge_path_sigmoid.1} parent=0 // pred_check_branch
    %33 = sbr.rel (0) target = $region13
  $region12: #{merge_path_sigmoid.1} parent=0 // pred_region
    _
  $region13: #{merge_path_sigmoid.1} parent=0 // pred_fallthru
    _

</llo_original>
